<compile_context>
chip_gen: v5e
topology: v5e:2x2
jax: 0.10.0
libtpu: 0.0.40
codegen_flags: <defaults>
</compile_context>

<pallas_src>
import functools
import math

import jax
import jax.numpy as jnp
from jax import lax
from jax.experimental import pallas as pl
from jax.experimental.pallas import tpu as pltpu


# ----------------------------------------------------------------------------
# Fused per-batch kernel: projections + per-head attention + output projection
# ----------------------------------------------------------------------------
def _fused_attention_kernel(k_ref, q_ref, wk_ref, bk_ref, wq_ref, bq_ref,
                            wp_ref, bp_ref, out_ref, score_ref,
                            *, n_head, hidden_dim):
    k = k_ref[0]                       # (k_len, embed)
    q = q_ref[0]                       # (q_len, embed)

    # All-head projections in one lane-dense matmul each.
    kx = jnp.dot(k, wk_ref[...], preferred_element_type=jnp.float32) + bk_ref[...]
    qx = jnp.dot(q, wq_ref[...], preferred_element_type=jnp.float32) + bq_ref[...]
    # kx: (k_len, n_head*hidden), qx: (q_len, n_head*hidden)

    inv_sqrt_d = 1.0 / math.sqrt(hidden_dim)
    q_len = q.shape[0]
    out_dim = bp_ref.shape[-1]
    acc = jnp.zeros((q_len, out_dim), dtype=jnp.float32)

    H = hidden_dim
    for h in range(n_head):            # static, unrolled
        kx_h = kx[:, h * H:(h + 1) * H]                      # (k_len, H)
        qx_h = qx[:, h * H:(h + 1) * H]                      # (q_len, H)

        # qx_h @ kx_h^T without materializing a transpose.
        s = lax.dot_general(qx_h, kx_h, (((1,), (1,)), ((), ())),
                            preferred_element_type=jnp.float32)
        s = s * inv_sqrt_d                                   # (q_len, k_len)

        # Numerically-stable softmax along last dim.
        m = jnp.max(s, axis=-1, keepdims=True)
        e = jnp.exp(s - m)
        denom = jnp.sum(e, axis=-1, keepdims=True)
        p = e * pl.reciprocal(denom, approx=True)            # (q_len, k_len)

        score_ref[h, 0, :, :] = p.astype(score_ref.dtype)

        o_h = jnp.dot(p, kx_h, preferred_element_type=jnp.float32)   # (q_len, H)

        # Head h's slice of the projection weight (static sublane slice).
        wp_h = wp_ref[h * H:(h + 1) * H, :]                  # (H, out_dim)
        acc = acc + jnp.dot(o_h, wp_h, preferred_element_type=jnp.float32)

    out_ref[0] = (acc + bp_ref[...]).astype(out_ref.dtype)


def attention_forward(k, q, params, *, n_head, hidden_dim):
    """k: (mb, k_len, embed) f32; q: (mb, q_len, embed) f32."""
    if q.ndim == 2:
        q = q[:, None, :]
    if k.ndim == 2:
        k = k[:, None, :]

    mb, k_len, embed_dim = k.shape
    _, q_len, _ = q.shape
    nh_hidden = n_head * hidden_dim
    out_dim = params["w_proj"].shape[1]

    wk = params["w_k"]        # (embed, n_head*hidden)
    bk = params["b_k"]        # (1, n_head*hidden)
    wq = params["w_q"]        # (embed, n_head*hidden)
    bq = params["b_q"]        # (1, n_head*hidden)
    wp = params["w_proj"]     # (n_head*hidden, out_dim)
    bp = params["b_proj"]     # (1, out_dim)

    fused = pl.pallas_call(
        functools.partial(_fused_attention_kernel,
                          n_head=n_head, hidden_dim=hidden_dim),
        out_shape=(
            jax.ShapeDtypeStruct((mb, q_len, out_dim), jnp.float32),
            jax.ShapeDtypeStruct((n_head, mb, q_len, k_len), jnp.float32),
        ),
        grid_spec=pltpu.PrefetchScalarGridSpec(
            num_scalar_prefetch=0,
            grid=(mb,),
            in_specs=[
                pl.BlockSpec((1, k_len, embed_dim), lambda b: (b, 0, 0)),   # k
                pl.BlockSpec((1, q_len, embed_dim), lambda b: (b, 0, 0)),   # q
                pl.BlockSpec((embed_dim, nh_hidden), lambda b: (0, 0)),     # Wk
                pl.BlockSpec((1, nh_hidden), lambda b: (0, 0)),             # bk
                pl.BlockSpec((embed_dim, nh_hidden), lambda b: (0, 0)),     # Wq
                pl.BlockSpec((1, nh_hidden), lambda b: (0, 0)),             # bq
                pl.BlockSpec((nh_hidden, out_dim), lambda b: (0, 0)),       # Wp
                pl.BlockSpec((1, out_dim), lambda b: (0, 0)),               # bp
            ],
            out_specs=[
                pl.BlockSpec((1, q_len, out_dim), lambda b: (b, 0, 0)),
                pl.BlockSpec((n_head, 1, q_len, k_len), lambda b: (0, b, 0, 0)),
            ],
        ),
        compiler_params=pltpu.CompilerParams(
            dimension_semantics=("parallel",)),
    )
    output, score = fused(k, q, wk, bk, wq, bq, wp, bp)

    # torch score layout: (n_head*mb, q_len, k_len), head-major.
    score = score.reshape(n_head * mb, q_len, k_len)

    # dropout(p=0) is identity (eval).
    if output.shape[1] == 1:
        output = jnp.squeeze(output)   # matches torch .squeeze() (all size-1 dims)
    return output, score


# ----------------------------------------------------------------------------
# Deterministic parameter init (mirrors nn.Linear default uniform init shapes)
# ----------------------------------------------------------------------------
def init_params(key, embed_dim, hidden_dim, n_head, out_dim):
    ks = jax.random.split(key, 6)
    lim_in = 1.0 / math.sqrt(embed_dim)
    lim_proj = 1.0 / math.sqrt(n_head * hidden_dim)
    nh_hidden = n_head * hidden_dim

    # nn.Linear(embed, n_head*hidden): weight (n_head*hidden, embed).
    # Stored pre-transposed as (embed, n_head*hidden); head blocks are
    # contiguous in the last dim (same as torch's .view(..., n_head, hidden)).
    def lin_w(k):
        w = jax.random.uniform(k, (nh_hidden, embed_dim),
                               jnp.float32, -lim_in, lim_in)
        return w.T                                            # (embed, nh*hidden)

    def lin_b(k):
        return jax.random.uniform(k, (1, nh_hidden), jnp.float32,
                                  -lim_in, lim_in)

    w_proj = jax.random.uniform(ks[4], (out_dim, nh_hidden),
                                jnp.float32, -lim_proj, lim_proj).T
    b_proj = jax.random.uniform(ks[5], (out_dim,), jnp.float32,
                                -lim_proj, lim_proj).reshape(1, out_dim)
    # self.weight (hidden_dim*2,) exists in the torch module but is unused
    # in forward, so it is not materialized here.
    return {
        "w_k": lin_w(ks[0]), "b_k": lin_b(ks[1]),
        "w_q": lin_w(ks[2]), "b_q": lin_b(ks[3]),
        "w_proj": w_proj, "b_proj": b_proj,
    }


# ----------------------------------------------------------------------------
# Pure-JAX reference (for correctness check)
# ----------------------------------------------------------------------------
def _reference(k, q, params, n_head, hidden_dim):
    mb, k_len, _ = k.shape
    q_len = q.shape[1]
    H = hidden_dim
    kx = k @ params["w_k"] + params["b_k"]       # (mb, k_len, nh*H)
    qx = q @ params["w_q"] + params["b_q"]       # (mb, q_len, nh*H)
    kx = kx.reshape(mb, k_len, n_head, H).transpose(2, 0, 1, 3)   # (nh, mb, k_len, H)
    qx = qx.reshape(mb, q_len, n_head, H).transpose(2, 0, 1, 3)
    s = jnp.einsum('hbqd,hbkd->hbqk', qx, kx) / math.sqrt(H)
    p = jax.nn.softmax(s, axis=-1)
    o = jnp.einsum('hbqk,hbkd->hbqd', p, kx)
    ctx = jnp.transpose(o, (1, 2, 0, 3)).reshape(mb, q_len, n_head * H)
    out = ctx @ params["w_proj"] + params["b_proj"]
    if out.shape[1] == 1:
        out = jnp.squeeze(out)
    return out, p.reshape(n_head * mb, q_len, k_len)


if __name__ == "__main__":
    embed_dim, n_head = 32, 2
    hidden_dim = embed_dim // n_head      # default hidden_dim
    out_dim = embed_dim                   # default out_dim
    mb, k_len, q_len = 2, 8, 8

    key = jax.random.PRNGKey(0)
    kp, kk, kq = jax.random.split(key, 3)
    params = init_params(kp, embed_dim, hidden_dim, n_head, out_dim)
    k_in = jax.random.normal(kk, (mb, k_len, embed_dim), jnp.float32)
    q_in = jax.random.normal(kq, (mb, q_len, embed_dim), jnp.float32)

    out, score = attention_forward(k_in, q_in, params,
                                   n_head=n_head, hidden_dim=hidden_dim)
    out, score = jax.block_until_ready((out, score))

    ref_out, ref_score = _reference(k_in, q_in, params, n_head, hidden_dim)
    # Tolerances account for pl.reciprocal(approx=True) in the softmax.
    assert jnp.allclose(out, ref_out, atol=2e-3, rtol=2e-3), \
        float(jnp.max(jnp.abs(out - ref_out)))
    assert jnp.allclose(score, ref_score, atol=2e-3, rtol=2e-3), \
        float(jnp.max(jnp.abs(score - ref_score)))

    print("KERNEL_OK")
</pallas_src>

<mosaic_0001>
module attributes {stable_mosaic.version = 11 : i64} {
  func.func @_fused_attention_kernel(%arg0: i32, %arg1: memref<1x8x32xf32, #tpu.memory_space<vmem>>, %arg2: memref<1x8x32xf32, #tpu.memory_space<vmem>>, %arg3: memref<32x32xf32, #tpu.memory_space<vmem>>, %arg4: memref<1x32xf32, #tpu.memory_space<vmem>>, %arg5: memref<32x32xf32, #tpu.memory_space<vmem>>, %arg6: memref<1x32xf32, #tpu.memory_space<vmem>>, %arg7: memref<32x32xf32, #tpu.memory_space<vmem>>, %arg8: memref<1x32xf32, #tpu.memory_space<vmem>>, %arg9: memref<1x8x32xf32, #tpu.memory_space<vmem>>, %arg10: memref<2x1x8x8xf32, #tpu.memory_space<vmem>>) attributes {dimension_semantics = [#tpu.dimension_semantics<parallel>], iteration_bounds = array<i64: 2>, scalar_prefetch = 0 : i64, scratch_operands = 0 : i64, tpu.core_type = #tpu.core_type<tc>, window_params = [{transform_indices = @transform_0, window_bounds = array<i64: 1, 8, 32>}, {transform_indices = @transform_1, window_bounds = array<i64: 1, 8, 32>}, {pipeline_mode = #tpu.pipeline_mode<synchronous>, transform_indices = @transform_2, window_bounds = array<i64: 32, 32>}, {pipeline_mode = #tpu.pipeline_mode<synchronous>, transform_indices = @transform_3, window_bounds = array<i64: 1, 32>}, {pipeline_mode = #tpu.pipeline_mode<synchronous>, transform_indices = @transform_4, window_bounds = array<i64: 32, 32>}, {pipeline_mode = #tpu.pipeline_mode<synchronous>, transform_indices = @transform_5, window_bounds = array<i64: 1, 32>}, {pipeline_mode = #tpu.pipeline_mode<synchronous>, transform_indices = @transform_6, window_bounds = array<i64: 32, 32>}, {pipeline_mode = #tpu.pipeline_mode<synchronous>, transform_indices = @transform_7, window_bounds = array<i64: 1, 32>}, {transform_indices = @transform_8, window_bounds = array<i64: 1, 8, 32>}, {transform_indices = @transform_9, window_bounds = array<i64: 2, 1, 8, 8>}]} {
    %c0 = arith.constant 0 : index
    %c0_0 = arith.constant 0 : index
    %c0_1 = arith.constant 0 : index
    %0 = vector.load %arg1[%c0, %c0_0, %c0_1] : memref<1x8x32xf32, #tpu.memory_space<vmem>>, vector<1x8x32xf32>
    %1 = vector.shape_cast %0 : vector<1x8x32xf32> to vector<8x32xf32>
    %c0_2 = arith.constant 0 : index
    %c0_3 = arith.constant 0 : index
    %c0_4 = arith.constant 0 : index
    %2 = vector.load %arg2[%c0_2, %c0_3, %c0_4] : memref<1x8x32xf32, #tpu.memory_space<vmem>>, vector<1x8x32xf32>
    %3 = vector.shape_cast %2 : vector<1x8x32xf32> to vector<8x32xf32>
    %c0_5 = arith.constant 0 : index
    %c0_6 = arith.constant 0 : index
    %4 = vector.load %arg3[%c0_5, %c0_6] : memref<32x32xf32, #tpu.memory_space<vmem>>, vector<32x32xf32>
    %cst = arith.constant dense<0.000000e+00> : vector<8x32xf32>
    %5 = tpu.matmul %1, %4, %cst {dimension_numbers = #tpu.dot_dimension_numbers<[1], [0], [0], [1], [0, 0, 1, 1], [], []>} : vector<8x32xf32>, vector<32x32xf32>, vector<8x32xf32> -> vector<8x32xf32>
    %c0_7 = arith.constant 0 : index
    %c0_8 = arith.constant 0 : index
    %6 = vector.load %arg4[%c0_7, %c0_8] : memref<1x32xf32, #tpu.memory_space<vmem>>, vector<1x32xf32>
    %7 = vector.broadcast %6 : vector<1x32xf32> to vector<8x32xf32>
    %8 = arith.addf %5, %7 : vector<8x32xf32>
    %c0_9 = arith.constant 0 : index
    %c0_10 = arith.constant 0 : index
    %9 = vector.load %arg5[%c0_9, %c0_10] : memref<32x32xf32, #tpu.memory_space<vmem>>, vector<32x32xf32>
    %cst_11 = arith.constant dense<0.000000e+00> : vector<8x32xf32>
    %10 = tpu.matmul %3, %9, %cst_11 {dimension_numbers = #tpu.dot_dimension_numbers<[1], [0], [0], [1], [0, 0, 1, 1], [], []>} : vector<8x32xf32>, vector<32x32xf32>, vector<8x32xf32> -> vector<8x32xf32>
    %c0_12 = arith.constant 0 : index
    %c0_13 = arith.constant 0 : index
    %11 = vector.load %arg6[%c0_12, %c0_13] : memref<1x32xf32, #tpu.memory_space<vmem>>, vector<1x32xf32>
    %12 = vector.broadcast %11 : vector<1x32xf32> to vector<8x32xf32>
    %13 = arith.addf %10, %12 : vector<8x32xf32>
    %cst_14 = arith.constant 0.000000e+00 : f32
    %14 = vector.broadcast %cst_14 : f32 to vector<8x32xf32>
    %15 = vector.extract_strided_slice %8 {offsets = [0, 0], sizes = [8, 16], strides = [1, 1]} : vector<8x32xf32> to vector<8x16xf32>
    %16 = vector.extract_strided_slice %13 {offsets = [0, 0], sizes = [8, 16], strides = [1, 1]} : vector<8x32xf32> to vector<8x16xf32>
    %cst_15 = arith.constant dense<0.000000e+00> : vector<8x8xf32>
    %17 = tpu.matmul %16, %15, %cst_15 {dimension_numbers = #tpu.dot_dimension_numbers<[1], [1], [0], [0], [0, 0, 1, 0], [], []>} : vector<8x16xf32>, vector<8x16xf32>, vector<8x8xf32> -> vector<8x8xf32>
    %cst_16 = arith.constant 2.500000e-01 : f32
    %18 = vector.broadcast %cst_16 : f32 to vector<8x8xf32>
    %19 = arith.mulf %17, %18 : vector<8x8xf32>
    %cst_17 = arith.constant dense<0xFF800000> : vector<8xf32>
    %20 = vector.multi_reduction <maximumf>, %19, %cst_17 [1] : vector<8x8xf32> to vector<8xf32>
    %21 = vector.shape_cast %20 : vector<8xf32> to vector<8x1xf32>
    %22 = vector.broadcast %21 : vector<8x1xf32> to vector<8x8xf32>
    %23 = arith.subf %19, %22 : vector<8x8xf32>
    %24 = math.exp %23 : vector<8x8xf32>
    %cst_18 = arith.constant dense<0.000000e+00> : vector<8xf32>
    %25 = vector.multi_reduction <add>, %24, %cst_18 [1] : vector<8x8xf32> to vector<8xf32>
    %26 = vector.shape_cast %25 : vector<8xf32> to vector<8x1xf32>
    %27 = tpu.reciprocal %26 {approx = true} : vector<8x1xf32> -> vector<8x1xf32>
    %28 = vector.broadcast %27 : vector<8x1xf32> to vector<8x8xf32>
    %29 = arith.mulf %24, %28 : vector<8x8xf32>
    %c0_19 = arith.constant 0 : index
    %c0_20 = arith.constant 0 : index
    %c0_21 = arith.constant 0 : index
    %c0_22 = arith.constant 0 : index
    %30 = vector.load %arg10[%c0_19, %c0_20, %c0_21, %c0_22] : memref<2x1x8x8xf32, #tpu.memory_space<vmem>>, vector<1x1x8x8xf32>
    %31 = vector.shape_cast %30 : vector<1x1x8x8xf32> to vector<8x8xf32>
    %32 = vector.shape_cast %29 : vector<8x8xf32> to vector<1x1x8x8xf32>
    tpu.vector_store %arg10[%c0_19, %c0_20, %c0_21, %c0_22], %32 {strides = array<i32>} : memref<2x1x8x8xf32, #tpu.memory_space<vmem>>, vector<1x1x8x8xf32>,
    %cst_23 = arith.constant dense<0.000000e+00> : vector<8x16xf32>
    %33 = tpu.matmul %29, %15, %cst_23 {dimension_numbers = #tpu.dot_dimension_numbers<[1], [0], [0], [1], [0, 0, 1, 1], [], []>} : vector<8x8xf32>, vector<8x16xf32>, vector<8x16xf32> -> vector<8x16xf32>
    %c0_24 = arith.constant 0 : index
    %c0_25 = arith.constant 0 : index
    %34 = vector.load %arg7[%c0_24, %c0_25] : memref<32x32xf32, #tpu.memory_space<vmem>>, vector<16x32xf32>
    %cst_26 = arith.constant dense<0.000000e+00> : vector<8x32xf32>
    %35 = tpu.matmul %33, %34, %cst_26 {dimension_numbers = #tpu.dot_dimension_numbers<[1], [0], [0], [1], [0, 0, 1, 1], [], []>} : vector<8x16xf32>, vector<16x32xf32>, vector<8x32xf32> -> vector<8x32xf32>
    %36 = arith.addf %14, %35 : vector<8x32xf32>
    %37 = vector.extract_strided_slice %8 {offsets = [0, 16], sizes = [8, 16], strides = [1, 1]} : vector<8x32xf32> to vector<8x16xf32>
    %38 = vector.extract_strided_slice %13 {offsets = [0, 16], sizes = [8, 16], strides = [1, 1]} : vector<8x32xf32> to vector<8x16xf32>
    %cst_27 = arith.constant dense<0.000000e+00> : vector<8x8xf32>
    %39 = tpu.matmul %38, %37, %cst_27 {dimension_numbers = #tpu.dot_dimension_numbers<[1], [1], [0], [0], [0, 0, 1, 0], [], []>} : vector<8x16xf32>, vector<8x16xf32>, vector<8x8xf32> -> vector<8x8xf32>
    %cst_28 = arith.constant 2.500000e-01 : f32
    %40 = vector.broadcast %cst_28 : f32 to vector<8x8xf32>
    %41 = arith.mulf %39, %40 : vector<8x8xf32>
    %cst_29 = arith.constant dense<0xFF800000> : vector<8xf32>
    %42 = vector.multi_reduction <maximumf>, %41, %cst_29 [1] : vector<8x8xf32> to vector<8xf32>
    %43 = vector.shape_cast %42 : vector<8xf32> to vector<8x1xf32>
    %44 = vector.broadcast %43 : vector<8x1xf32> to vector<8x8xf32>
    %45 = arith.subf %41, %44 : vector<8x8xf32>
    %46 = math.exp %45 : vector<8x8xf32>
    %cst_30 = arith.constant dense<0.000000e+00> : vector<8xf32>
    %47 = vector.multi_reduction <add>, %46, %cst_30 [1] : vector<8x8xf32> to vector<8xf32>
    %48 = vector.shape_cast %47 : vector<8xf32> to vector<8x1xf32>
    %49 = tpu.reciprocal %48 {approx = true} : vector<8x1xf32> -> vector<8x1xf32>
    %50 = vector.broadcast %49 : vector<8x1xf32> to vector<8x8xf32>
    %51 = arith.mulf %46, %50 : vector<8x8xf32>
    %c1 = arith.constant 1 : index
    %c0_31 = arith.constant 0 : index
    %c0_32 = arith.constant 0 : index
    %c0_33 = arith.constant 0 : index
    %52 = vector.load %arg10[%c1, %c0_31, %c0_32, %c0_33] : memref<2x1x8x8xf32, #tpu.memory_space<vmem>>, vector<1x1x8x8xf32>
    %53 = vector.shape_cast %52 : vector<1x1x8x8xf32> to vector<8x8xf32>
    %54 = vector.shape_cast %51 : vector<8x8xf32> to vector<1x1x8x8xf32>
    tpu.vector_store %arg10[%c1, %c0_31, %c0_32, %c0_33], %54 {strides = array<i32>} : memref<2x1x8x8xf32, #tpu.memory_space<vmem>>, vector<1x1x8x8xf32>,
    %cst_34 = arith.constant dense<0.000000e+00> : vector<8x16xf32>
    %55 = tpu.matmul %51, %37, %cst_34 {dimension_numbers = #tpu.dot_dimension_numbers<[1], [0], [0], [1], [0, 0, 1, 1], [], []>} : vector<8x8xf32>, vector<8x16xf32>, vector<8x16xf32> -> vector<8x16xf32>
    %c16 = arith.constant 16 : index
    %c0_35 = arith.constant 0 : index
    %56 = vector.load %arg7[%c16, %c0_35] : memref<32x32xf32, #tpu.memory_space<vmem>>, vector<16x32xf32>
    %cst_36 = arith.constant dense<0.000000e+00> : vector<8x32xf32>
    %57 = tpu.matmul %55, %56, %cst_36 {dimension_numbers = #tpu.dot_dimension_numbers<[1], [0], [0], [1], [0, 0, 1, 1], [], []>} : vector<8x16xf32>, vector<16x32xf32>, vector<8x32xf32> -> vector<8x32xf32>
    %58 = arith.addf %36, %57 : vector<8x32xf32>
    %c0_37 = arith.constant 0 : index
    %c0_38 = arith.constant 0 : index
    %59 = vector.load %arg8[%c0_37, %c0_38] : memref<1x32xf32, #tpu.memory_space<vmem>>, vector<1x32xf32>
    %60 = vector.broadcast %59 : vector<1x32xf32> to vector<8x32xf32>
    %61 = arith.addf %58, %60 : vector<8x32xf32>
    %c0_39 = arith.constant 0 : index
    %c0_40 = arith.constant 0 : index
    %c0_41 = arith.constant 0 : index
    %62 = vector.load %arg9[%c0_39, %c0_40, %c0_41] : memref<1x8x32xf32, #tpu.memory_space<vmem>>, vector<1x8x32xf32>
    %63 = vector.shape_cast %62 : vector<1x8x32xf32> to vector<8x32xf32>
    %64 = vector.shape_cast %61 : vector<8x32xf32> to vector<1x8x32xf32>
    tpu.vector_store %arg9[%c0_39, %c0_40, %c0_41], %64 {strides = array<i32>} : memref<1x8x32xf32, #tpu.memory_space<vmem>>, vector<1x8x32xf32>,
    return
  }
  func.func @transform_0(%arg0: i32) -> (i32, i32, i32) {
    %c0_i32 = arith.constant 0 : i32
    %c0_i32_0 = arith.constant 0 : i32
    %c0_i32_1 = arith.constant 0 : i32
    return %arg0, %c0_i32, %c0_i32_0 : i32, i32, i32
  }
  func.func @transform_1(%arg0: i32) -> (i32, i32, i32) {
    %c0_i32 = arith.constant 0 : i32
    %c0_i32_0 = arith.constant 0 : i32
    %c0_i32_1 = arith.constant 0 : i32
    return %arg0, %c0_i32, %c0_i32_0 : i32, i32, i32
  }
  func.func @transform_2(%arg0: i32) -> (i32, i32) {
    %c0_i32 = arith.constant 0 : i32
    %c0_i32_0 = arith.constant 0 : i32
    %c0_i32_1 = arith.constant 0 : i32
    return %c0_i32, %c0_i32_0 : i32, i32
  }
  func.func @transform_3(%arg0: i32) -> (i32, i32) {
    %c0_i32 = arith.constant 0 : i32
    %c0_i32_0 = arith.constant 0 : i32
    %c0_i32_1 = arith.constant 0 : i32
    return %c0_i32, %c0_i32_0 : i32, i32
  }
  func.func @transform_4(%arg0: i32) -> (i32, i32) {
    %c0_i32 = arith.constant 0 : i32
    %c0_i32_0 = arith.constant 0 : i32
    %c0_i32_1 = arith.constant 0 : i32
    return %c0_i32, %c0_i32_0 : i32, i32
  }
  func.func @transform_5(%arg0: i32) -> (i32, i32) {
    %c0_i32 = arith.constant 0 : i32
    %c0_i32_0 = arith.constant 0 : i32
    %c0_i32_1 = arith.constant 0 : i32
    return %c0_i32, %c0_i32_0 : i32, i32
  }
  func.func @transform_6(%arg0: i32) -> (i32, i32) {
    %c0_i32 = arith.constant 0 : i32
    %c0_i32_0 = arith.constant 0 : i32
    %c0_i32_1 = arith.constant 0 : i32
    return %c0_i32, %c0_i32_0 : i32, i32
  }
  func.func @transform_7(%arg0: i32) -> (i32, i32) {
    %c0_i32 = arith.constant 0 : i32
    %c0_i32_0 = arith.constant 0 : i32
    %c0_i32_1 = arith.constant 0 : i32
    return %c0_i32, %c0_i32_0 : i32, i32
  }
  func.func @transform_8(%arg0: i32) -> (i32, i32, i32) {
    %c0_i32 = arith.constant 0 : i32
    %c0_i32_0 = arith.constant 0 : i32
    %c0_i32_1 = arith.constant 0 : i32
    return %arg0, %c0_i32, %c0_i32_0 : i32, i32, i32
  }
  func.func @transform_9(%arg0: i32) -> (i32, i32, i32, i32) {
    %c0_i32 = arith.constant 0 : i32
    %c0_i32_0 = arith.constant 0 : i32
    %c0_i32_1 = arith.constant 0 : i32
    %c0_i32_2 = arith.constant 0 : i32
    return %c0_i32, %arg0, %c0_i32_0, %c0_i32_1 : i32, i32, i32, i32
  }
}

</mosaic_0001>

<llo_original>
// kernel: tpu_custom_call.1
$region0: #{tpu_custom_call.1}
  #allocation0 [shape = 'u32[]', space=smem, size = 0x4, offset = 0x4, fixed_abs, tag = 'smem constant byte address 0x4 - core index']
  #allocation1 [shape = 'u32[72,128]{1,0:T(1,128)}', space=vmem, size = 0x9000, scoped, tag = 'internal scratch']
  %s0 = inlined_call_operand.hbm [shape: f32[2,8,32], index: 0, kind: input, shape index: {}]
  %s1 = inlined_call_operand.hbm [shape: f32[2,8,32], index: 1, kind: input, shape index: {}]
  %s2 = inlined_call_operand.hbm [shape: f32[32,32], index: 2, kind: input, shape index: {}]
  %s3 = inlined_call_operand.vmem [shape: f32[1,32], index: 3, kind: input, shape index: {}]
  %s4 = inlined_call_operand.hbm [shape: f32[32,32], index: 4, kind: input, shape index: {}]
  %s5 = inlined_call_operand.vmem [shape: f32[1,32], index: 5, kind: input, shape index: {}]
  %s6 = inlined_call_operand.hbm [shape: f32[32,32], index: 6, kind: input, shape index: {}]
  %s7 = inlined_call_operand.vmem [shape: f32[1,32], index: 7, kind: input, shape index: {}]
  %s8 = inlined_call_operand.hbm [shape: f32[2,8,32], index: 8, kind: output, shape index: {0}]
  %s9 = inlined_call_operand.hbm [shape: f32[2,2,8,8], index: 9, kind: output, shape index: {1}]
  %10 = xla_tuple %s8, %s9
  %s11 = sld [smem:[#allocation0]]
  $region93: #{tpu_custom_call.1} parent=0
    _
  %s13 = ssub.s32 1, %s11
  %s14 = scalar_select 0, %s13, %s11
  $region1: #{tpu_custom_call.1} parent=0
    #allocation2 [shape = 'u8[8192]{0}', space=vmem, size = 0x2000, scoped, tag = 'input window, operand 0']
    #allocation3 [shape = 's32[2]{0}', space=sflag, size = 0x8, scoped, tag = 'scoped memory for tpu_custom_call.1']
    #allocation4 [shape = 's32[2]{0}', space=sflag, size = 0x8, scoped, tag = 'scoped memory for tpu_custom_call.1']
    #allocation5 [shape = 'u8[8192]{0}', space=vmem, size = 0x2000, scoped, tag = 'input window, operand 1']
    #allocation6 [shape = 's32[2]{0}', space=sflag, size = 0x8, scoped, tag = 'scoped memory for tpu_custom_call.1']
    #allocation7 [shape = 'u8[16384]{0}', space=vmem, size = 0x4000, scoped, tag = 'input window, operand 2, single buffered']
    #allocation8 [shape = 'u8[16384]{0}', space=vmem, size = 0x4000, scoped, tag = 'input window, operand 4, single buffered']
    #allocation9 [shape = 's32[1]{0}', space=sflag, size = 0x4, scoped, tag = 'scoped memory for tpu_custom_call.1']
    #allocation10 [shape = 'u8[16384]{0}', space=vmem, size = 0x4000, scoped, tag = 'input window, operand 6, single buffered']
    #allocation11 [shape = 'u8[8192]{0}', space=vmem, size = 0x2000, scoped, tag = 'output window, operand 0']
    #allocation12 [shape = 'u8[16384]{0}', space=vmem, size = 0x4000, scoped, tag = 'output window, operand 1']
    #allocation13 [shape = 's32[2]{0}', space=sflag, size = 0x8, scoped, tag = 'scoped memory for tpu_custom_call.1']
    %15 = vsyncpa [#allocation3], 0
    %s16 = scalar_lea.sflag [#allocation3], 1
    %17 = vsyncpa %s16, 0
    %18 = vsyncpa [#allocation6], 0
    %s19 = scalar_lea.sflag [#allocation6], 1
    %20 = vsyncpa %s19, 0
    %21 = vsyncpa [#allocation9], 0
    %22 = vsyncpa [#allocation4], 0
    %s23 = scalar_lea.sflag [#allocation4], 1
    %24 = vsyncpa %s23, 0
    %25 = vsyncpa [#allocation13], 0
    %s26 = scalar_lea.sflag [#allocation13], 1
    %27 = vsyncpa %s26, 0
    loop: start=0, step=1, limit=4
    $region2: #{tpu_custom_call.1} parent=1 // loop_pre_header
      _
    $region3: #{tpu_custom_call.1} parent=1 // loop_header
      %s29 = sphi 0, %s33
      %p30 = scmp.ge.s32.totalorder %s29, 4
      %s39 = sphi 0, %s41
      %s42 = sphi 0, %s39
      %s43 = sphi 0, %s42
      %s59 = sphi 0, %s43
      %s65 = sphi 0, %s67
      %s68 = sphi 0, %s65
      %s69 = sphi 0, %s68
      %s85 = sphi 0, %s69
      %s89 = sphi 0, %s89
      %s91 = sphi 0, %s89
      %s92 = sphi 0, %s91
      %s106 = sphi 0, %s92
      %s110 = sphi 0, %s110
      %s112 = sphi 0, %s110
      %s113 = sphi 0, %s112
      %s127 = sphi 0, %s113
      %s131 = sphi 0, %s131
      %s133 = sphi 0, %s131
      %s134 = sphi 0, %s133
      %s148 = sphi 0, %s134
      %s152 = sphi 0, %s152
      %s154 = sphi 0, %s152
      %s155 = sphi 0, %s154
      %s169 = sphi 0, %s155
      %s173 = sphi 0, %s173
      %s175 = sphi 0, %s173
      %s176 = sphi 0, %s175
      %s190 = sphi 0, %s176
      %s194 = sphi 0, %s194
      %s196 = sphi 0, %s194
      %s197 = sphi 0, %s196
      %s211 = sphi 0, %s197
      %s217 = sphi 0, %s219
      %s220 = sphi 0, %s217
      %s221 = sphi 0, %s220
      %s237 = sphi 0, %s221
      %s243 = sphi 0, %s245
      %s246 = sphi 0, %s243
      %s247 = sphi 0, %s246
      %s263 = sphi 0, %s247
    $region4: #{tpu_custom_call.1} parent=1 // loop_header_branch
      %32 = sbr.rel (%p30) target = $region8
    $region5: #{tpu_custom_call.1} parent=1 // loop_body
      %s34 = ssub.s32 %s29, 1
      %s35 = ssub.s32 %s29, 2
      %s36 = sadd.s32 %s29, 1
      %s37 = ssub.s32 %s29, %s36
      %p38 = scmp.eq.s32.totalorder %s37, 0
      %s40 = sadd.s32 %s39, 1
      %s41 = scalar_select %p38, %s39, %s40
      %p44 = pneg %p38
      %p45 = scmp.eq.s32.totalorder %s29, 1
      %p46 = por %p44, %p45
      %p47 = scmp.ne.s32.totalorder %s39, %s42
      %p48 = scmp.eq.s32.totalorder %s29, 0
      %p49 = por %p47, %p48
      %p50 = scmp.ne.s32.totalorder %s39, %s42
      %p51 = scmp.eq.s32.totalorder %s34, 1
      %p52 = por %p50, %p51
      %p53 = scmp.ne.s32.totalorder %s42, %s43
      %p54 = scmp.eq.s32.totalorder %s34, 0
      %p55 = por %p53, %p54
      %p56 = scmp.ne.s32.totalorder %s42, %s43
      %p57 = scmp.eq.s32.totalorder %s35, 1
      %p58 = por %p56, %p57
      %p60 = scmp.ne.s32.totalorder %s43, %s59
      %p61 = scmp.eq.s32.totalorder %s35, 0
      %p62 = por %p60, %p61
      %s63 = ssub.s32 %s29, %s36
      %p64 = scmp.eq.s32.totalorder %s63, 0
      %s66 = sadd.s32 %s65, 1
      %s67 = scalar_select %p64, %s65, %s66
      %p70 = pneg %p64
      %p71 = scmp.eq.s32.totalorder %s29, 1
      %p72 = por %p70, %p71
      %p73 = scmp.ne.s32.totalorder %s65, %s68
      %p74 = scmp.eq.s32.totalorder %s29, 0
      %p75 = por %p73, %p74
      %p76 = scmp.ne.s32.totalorder %s65, %s68
      %p77 = scmp.eq.s32.totalorder %s34, 1
      %p78 = por %p76, %p77
      %p79 = scmp.ne.s32.totalorder %s68, %s69
      %p80 = scmp.eq.s32.totalorder %s34, 0
      %p81 = por %p79, %p80
      %p82 = scmp.ne.s32.totalorder %s68, %s69
      %p83 = scmp.eq.s32.totalorder %s35, 1
      %p84 = por %p82, %p83
      %p86 = scmp.ne.s32.totalorder %s69, %s85
      %p87 = scmp.eq.s32.totalorder %s35, 0
      %p88 = por %p86, %p87
      %s90 = sadd.s32 %s89, 1
      %p93 = scmp.eq.s32.totalorder %s29, 1
      %p94 = scmp.ne.s32.totalorder %s89, %s91
      %p95 = scmp.eq.s32.totalorder %s29, 0
      %p96 = por %p94, %p95
      %p97 = scmp.ne.s32.totalorder %s89, %s91
      %p98 = scmp.eq.s32.totalorder %s34, 1
      %p99 = por %p97, %p98
      %p100 = scmp.ne.s32.totalorder %s91, %s92
      %p101 = scmp.eq.s32.totalorder %s34, 0
      %p102 = por %p100, %p101
      %p103 = scmp.ne.s32.totalorder %s91, %s92
      %p104 = scmp.eq.s32.totalorder %s35, 1
      %p105 = por %p103, %p104
      %p107 = scmp.ne.s32.totalorder %s92, %s106
      %p108 = scmp.eq.s32.totalorder %s35, 0
      %p109 = por %p107, %p108
      %s111 = sadd.s32 %s110, 1
      %p114 = scmp.eq.s32.totalorder %s29, 1
      %p115 = scmp.ne.s32.totalorder %s110, %s112
      %p116 = scmp.eq.s32.totalorder %s29, 0
      %p117 = por %p115, %p116
      %p118 = scmp.ne.s32.totalorder %s110, %s112
      %p119 = scmp.eq.s32.totalorder %s34, 1
      %p120 = por %p118, %p119
      %p121 = scmp.ne.s32.totalorder %s112, %s113
      %p122 = scmp.eq.s32.totalorder %s34, 0
      %p123 = por %p121, %p122
      %p124 = scmp.ne.s32.totalorder %s112, %s113
      %p125 = scmp.eq.s32.totalorder %s35, 1
      %p126 = por %p124, %p125
      %p128 = scmp.ne.s32.totalorder %s113, %s127
      %p129 = scmp.eq.s32.totalorder %s35, 0
      %p130 = por %p128, %p129
      %s132 = sadd.s32 %s131, 1
      %p135 = scmp.eq.s32.totalorder %s29, 1
      %p136 = scmp.ne.s32.totalorder %s131, %s133
      %p137 = scmp.eq.s32.totalorder %s29, 0
      %p138 = por %p136, %p137
      %p139 = scmp.ne.s32.totalorder %s131, %s133
      %p140 = scmp.eq.s32.totalorder %s34, 1
      %p141 = por %p139, %p140
      %p142 = scmp.ne.s32.totalorder %s133, %s134
      %p143 = scmp.eq.s32.totalorder %s34, 0
      %p144 = por %p142, %p143
      %p145 = scmp.ne.s32.totalorder %s133, %s134
      %p146 = scmp.eq.s32.totalorder %s35, 1
      %p147 = por %p145, %p146
      %p149 = scmp.ne.s32.totalorder %s134, %s148
      %p150 = scmp.eq.s32.totalorder %s35, 0
      %p151 = por %p149, %p150
      %s153 = sadd.s32 %s152, 1
      %p156 = scmp.eq.s32.totalorder %s29, 1
      %p157 = scmp.ne.s32.totalorder %s152, %s154
      %p158 = scmp.eq.s32.totalorder %s29, 0
      %p159 = por %p157, %p158
      %p160 = scmp.ne.s32.totalorder %s152, %s154
      %p161 = scmp.eq.s32.totalorder %s34, 1
      %p162 = por %p160, %p161
      %p163 = scmp.ne.s32.totalorder %s154, %s155
      %p164 = scmp.eq.s32.totalorder %s34, 0
      %p165 = por %p163, %p164
      %p166 = scmp.ne.s32.totalorder %s154, %s155
      %p167 = scmp.eq.s32.totalorder %s35, 1
      %p168 = por %p166, %p167
      %p170 = scmp.ne.s32.totalorder %s155, %s169
      %p171 = scmp.eq.s32.totalorder %s35, 0
      %p172 = por %p170, %p171
      %s174 = sadd.s32 %s173, 1
      %p177 = scmp.eq.s32.totalorder %s29, 1
      %p178 = scmp.ne.s32.totalorder %s173, %s175
      %p179 = scmp.eq.s32.totalorder %s29, 0
      %p180 = por %p178, %p179
      %p181 = scmp.ne.s32.totalorder %s173, %s175
      %p182 = scmp.eq.s32.totalorder %s34, 1
      %p183 = por %p181, %p182
      %p184 = scmp.ne.s32.totalorder %s175, %s176
      %p185 = scmp.eq.s32.totalorder %s34, 0
      %p186 = por %p184, %p185
      %p187 = scmp.ne.s32.totalorder %s175, %s176
      %p188 = scmp.eq.s32.totalorder %s35, 1
      %p189 = por %p187, %p188
      %p191 = scmp.ne.s32.totalorder %s176, %s190
      %p192 = scmp.eq.s32.totalorder %s35, 0
      %p193 = por %p191, %p192
      %s195 = sadd.s32 %s194, 1
      %p198 = scmp.eq.s32.totalorder %s29, 1
      %p199 = scmp.ne.s32.totalorder %s194, %s196
      %p200 = scmp.eq.s32.totalorder %s29, 0
      %p201 = por %p199, %p200
      %p202 = scmp.ne.s32.totalorder %s194, %s196
      %p203 = scmp.eq.s32.totalorder %s34, 1
      %p204 = por %p202, %p203
      %p205 = scmp.ne.s32.totalorder %s196, %s197
      %p206 = scmp.eq.s32.totalorder %s34, 0
      %p207 = por %p205, %p206
      %p208 = scmp.ne.s32.totalorder %s196, %s197
      %p209 = scmp.eq.s32.totalorder %s35, 1
      %p210 = por %p208, %p209
      %p212 = scmp.ne.s32.totalorder %s197, %s211
      %p213 = scmp.eq.s32.totalorder %s35, 0
      %p214 = por %p212, %p213
      %s215 = ssub.s32 %s29, %s36
      %p216 = scmp.eq.s32.totalorder %s215, 0
      %s218 = sadd.s32 %s217, 1
      %s219 = scalar_select %p216, %s217, %s218
      %p222 = pneg %p216
      %p223 = scmp.eq.s32.totalorder %s29, 1
      %p224 = por %p222, %p223
      %p225 = scmp.ne.s32.totalorder %s217, %s220
      %p226 = scmp.eq.s32.totalorder %s29, 0
      %p227 = por %p225, %p226
      %p228 = scmp.ne.s32.totalorder %s217, %s220
      %p229 = scmp.eq.s32.totalorder %s34, 1
      %p230 = por %p228, %p229
      %p231 = scmp.ne.s32.totalorder %s220, %s221
      %p232 = scmp.eq.s32.totalorder %s34, 0
      %p233 = por %p231, %p232
      %p234 = scmp.ne.s32.totalorder %s220, %s221
      %p235 = scmp.eq.s32.totalorder %s35, 1
      %p236 = por %p234, %p235
      %p238 = scmp.ne.s32.totalorder %s221, %s237
      %p239 = scmp.eq.s32.totalorder %s35, 0
      %p240 = por %p238, %p239
      %s241 = ssub.s32 %s29, %s36
      %p242 = scmp.eq.s32.totalorder %s241, 0
      %s244 = sadd.s32 %s243, 1
      %s245 = scalar_select %p242, %s243, %s244
      %p248 = pneg %p242
      %p249 = scmp.eq.s32.totalorder %s29, 1
      %p250 = por %p248, %p249
      %p251 = scmp.ne.s32.totalorder %s243, %s246
      %p252 = scmp.eq.s32.totalorder %s29, 0
      %p253 = por %p251, %p252
      %p254 = scmp.ne.s32.totalorder %s243, %s246
      %p255 = scmp.eq.s32.totalorder %s34, 1
      %p256 = por %p254, %p255
      %p257 = scmp.ne.s32.totalorder %s246, %s247
      %p258 = scmp.eq.s32.totalorder %s34, 0
      %p259 = por %p257, %p258
      %p260 = scmp.ne.s32.totalorder %s246, %s247
      %p261 = scmp.eq.s32.totalorder %s35, 1
      %p262 = por %p260, %p261
      %p264 = scmp.ne.s32.totalorder %s247, %s263
      %p265 = scmp.eq.s32.totalorder %s35, 0
      %p266 = por %p264, %p265
      %p267 = scmp.le.s32.totalorder 1, %s29
      %p268 = scmp.lt.s32.totalorder %s29, 3
      %p269 = pnand %p267, %p268
      %p270 = pneg %p269
      // Predicated region
      $region9: #{tpu_custom_call.1} parent=5 // pred_check
        _
      $region10: #{tpu_custom_call.1} parent=5 // pred_check_branch
        %272 = sbr.rel (%p269) target = $region12
      $region11: #{tpu_custom_call.1} parent=5 // pred_region
        %s273 = ssub.s32 %s29, 1
        // Predicated region
        $region13: #{tpu_custom_call.1} parent=11 // pred_check
          %p274 = pneg %p102
        $region14: #{tpu_custom_call.1} parent=11 // pred_check_branch
          %276 = sbr.rel (%p274) target = $region16
        $region15: #{tpu_custom_call.1} parent=11 // pred_region
          %278 = vsyncadd [#allocation6], 0
          %s279 = sshll.u32 %s2, 4
          %s280 = int_to_ptr.hbm [resolvable:$true] %s279
          %s281 = sshll.u32 [#allocation7], 4
          %s282 = int_to_ptr.vmem [resolvable:$true] %s281
          %287 = dma.hbm_to_vmem [thread:$0]  %s280, 512, %s282, [#allocation6], 128, 128, 8
        $region16: #{tpu_custom_call.1} parent=11 // pred_fallthru
          _
        // Predicated region
        $region17: #{tpu_custom_call.1} parent=11 // pred_check
          %p288 = pneg %p123
        $region18: #{tpu_custom_call.1} parent=11 // pred_check_branch
          %290 = sbr.rel (%p288) target = $region20
        $region19: #{tpu_custom_call.1} parent=11 // pred_region
          _
        $region20: #{tpu_custom_call.1} parent=11 // pred_fallthru
          _
        // Predicated region
        $region21: #{tpu_custom_call.1} parent=11 // pred_check
          %p291 = pneg %p144
        $region22: #{tpu_custom_call.1} parent=11 // pred_check_branch
          %293 = sbr.rel (%p291) target = $region24
        $region23: #{tpu_custom_call.1} parent=11 // pred_region
          %295 = vsyncadd [#allocation9], 0
          %s296 = sshll.u32 %s4, 4
          %s297 = int_to_ptr.hbm [resolvable:$true] %s296
          %s298 = sshll.u32 [#allocation8], 4
          %s299 = int_to_ptr.vmem [resolvable:$true] %s298
          %304 = dma.hbm_to_vmem [thread:$0]  %s297, 512, %s299, [#allocation9], 128, 128, 8
        $region24: #{tpu_custom_call.1} parent=11 // pred_fallthru
          _
        // Predicated region
        $region25: #{tpu_custom_call.1} parent=11 // pred_check
          %p305 = pneg %p165
        $region26: #{tpu_custom_call.1} parent=11 // pred_check_branch
          %307 = sbr.rel (%p305) target = $region28
        $region27: #{tpu_custom_call.1} parent=11 // pred_region
          _
        $region28: #{tpu_custom_call.1} parent=11 // pred_fallthru
          _
        // Predicated region
        $region29: #{tpu_custom_call.1} parent=11 // pred_check
          %p308 = pneg %p186
        $region30: #{tpu_custom_call.1} parent=11 // pred_check_branch
          %310 = sbr.rel (%p308) target = $region32
        $region31: #{tpu_custom_call.1} parent=11 // pred_region
          %312 = vsyncadd [#allocation9], 0
          %s313 = sshll.u32 %s6, 4
          %s314 = int_to_ptr.hbm [resolvable:$true] %s313
          %s315 = sshll.u32 [#allocation10], 4
          %s316 = int_to_ptr.vmem [resolvable:$true] %s315
          %321 = dma.hbm_to_vmem [thread:$0]  %s314, 512, %s316, [#allocation9], 128, 128, 8
        $region32: #{tpu_custom_call.1} parent=11 // pred_fallthru
          _
        // Predicated region
        $region33: #{tpu_custom_call.1} parent=11 // pred_check
          %p322 = pneg %p207
        $region34: #{tpu_custom_call.1} parent=11 // pred_check_branch
          %324 = sbr.rel (%p322) target = $region36
        $region35: #{tpu_custom_call.1} parent=11 // pred_region
          _
        $region36: #{tpu_custom_call.1} parent=11 // pred_fallthru
          _
      $region12: #{tpu_custom_call.1} parent=5 // pred_fallthru
        _
      %p325 = scmp.lt.s32.totalorder %s29, 2
      // Predicated region
      $region37: #{tpu_custom_call.1} parent=5 // pred_check
        %p326 = pneg %p325
      $region38: #{tpu_custom_call.1} parent=5 // pred_check_branch
        %328 = sbr.rel (%p326) target = $region40
      $region39: #{tpu_custom_call.1} parent=5 // pred_region
        // Predicated region
        $region41: #{tpu_custom_call.1} parent=39 // pred_check
          %p329 = pneg %p49
        $region42: #{tpu_custom_call.1} parent=39 // pred_check_branch
          %331 = sbr.rel (%p329) target = $region44
        $region43: #{tpu_custom_call.1} parent=39 // pred_region
          %s332 = sand.u32 %s39, 1
          %s333 = scalar_lea.sflag [#allocation3], %s332
          %s334 = sand.u32 %s39, 1
          %s335 = smul.addr %s334, 8
          %s336 = scalar_lea.vmem [#allocation2], %s335
          %338 = vsyncadd %s333, 0
          %s339 = smul.addr %s29, 8
          %s340 = scalar_lea.hbm %s0, %s339
          %s342 = sshll.u32 %s340, 4
          %s343 = int_to_ptr.hbm [resolvable:$true] %s342
          %s344 = sshll.u32 %s336, 4
          %s345 = int_to_ptr.vmem [resolvable:$true] %s344
          %347 = dma.hbm_to_vmem [thread:$0]  %s343, 128, %s345, %s333
        $region44: #{tpu_custom_call.1} parent=39 // pred_fallthru
          _
        // Predicated region
        $region45: #{tpu_custom_call.1} parent=39 // pred_check
          %p348 = pneg %p75
        $region46: #{tpu_custom_call.1} parent=39 // pred_check_branch
          %350 = sbr.rel (%p348) target = $region48
        $region47: #{tpu_custom_call.1} parent=39 // pred_region
          %s351 = sand.u32 %s29, 1
          %s352 = scalar_lea.sflag [#allocation6], %s351
          %s353 = sand.u32 %s65, 1
          %s354 = smul.addr %s353, 8
          %s355 = scalar_lea.vmem [#allocation5], %s354
          %357 = vsyncadd %s352, 0
          %s358 = smul.addr %s29, 8
          %s359 = scalar_lea.hbm %s1, %s358
          %s361 = sshll.u32 %s359, 4
          %s362 = int_to_ptr.hbm [resolvable:$true] %s361
          %s363 = sshll.u32 %s355, 4
          %s364 = int_to_ptr.vmem [resolvable:$true] %s363
          %366 = dma.hbm_to_vmem [thread:$0]  %s362, 128, %s364, %s352
        $region48: #{tpu_custom_call.1} parent=39 // pred_fallthru
          _
      $region40: #{tpu_custom_call.1} parent=5 // pred_fallthru
        _
      %p367 = scmp.le.s32.totalorder 1, %s29
      %p368 = scmp.lt.s32.totalorder %s29, 3
      %p369 = pnand %p367, %p368
      %p370 = pneg %p369
      // Predicated region
      $region49: #{tpu_custom_call.1} parent=5 // pred_check
        _
      $region50: #{tpu_custom_call.1} parent=5 // pred_check_branch
        %372 = sbr.rel (%p369) target = $region52
      $region51: #{tpu_custom_call.1} parent=5 // pred_region
        %s373 = ssub.s32 %s29, 1
        %s374 = sand.u32 %s42, 1
        %s375 = scalar_lea.sflag [#allocation3], %s374
        %s376 = sand.u32 %s42, 1
        %s377 = smul.addr %s376, 8
        %s378 = scalar_lea.vmem [#allocation2], %s377
        // Predicated region
        $region53: #{tpu_custom_call.1} parent=51 // pred_check
          %p379 = pneg %p55
        $region54: #{tpu_custom_call.1} parent=51 // pred_check_branch
          %381 = sbr.rel (%p379) target = $region56
        $region55: #{tpu_custom_call.1} parent=51 // pred_region
          %383 = dma.done %s375, 128
        $region56: #{tpu_custom_call.1} parent=51 // pred_fallthru
          _
        %s384 = sand.u32 %s34, 1
        %s385 = scalar_lea.sflag [#allocation6], %s384
        %s386 = sand.u32 %s68, 1
        %s387 = smul.addr %s386, 8
        %s388 = scalar_lea.vmem [#allocation5], %s387
        // Predicated region
        $region57: #{tpu_custom_call.1} parent=51 // pred_check
          %p389 = pneg %p81
        $region58: #{tpu_custom_call.1} parent=51 // pred_check_branch
          %391 = sbr.rel (%p389) target = $region60
        $region59: #{tpu_custom_call.1} parent=51 // pred_region
          %393 = dma.done %s385, 128
        $region60: #{tpu_custom_call.1} parent=51 // pred_fallthru
          _
        // Predicated region
        $region61: #{tpu_custom_call.1} parent=51 // pred_check
          %p394 = pneg %p102
        $region62: #{tpu_custom_call.1} parent=51 // pred_check_branch
          %396 = sbr.rel (%p394) target = $region64
        $region63: #{tpu_custom_call.1} parent=51 // pred_region
          %398 = dma.done [#allocation6], 512
        $region64: #{tpu_custom_call.1} parent=51 // pred_fallthru
          _
        // Predicated region
        $region65: #{tpu_custom_call.1} parent=51 // pred_check
          %p399 = pneg %p144
        $region66: #{tpu_custom_call.1} parent=51 // pred_check_branch
          %401 = sbr.rel (%p399) target = $region68
        $region67: #{tpu_custom_call.1} parent=51 // pred_region
          %403 = dma.done [#allocation9], 512
        $region68: #{tpu_custom_call.1} parent=51 // pred_fallthru
          _
        // Predicated region
        $region69: #{tpu_custom_call.1} parent=51 // pred_check
          %p404 = pneg %p186
        $region70: #{tpu_custom_call.1} parent=51 // pred_check_branch
          %406 = sbr.rel (%p404) target = $region72
        $region71: #{tpu_custom_call.1} parent=51 // pred_region
          %408 = dma.done [#allocation9], 512
        $region72: #{tpu_custom_call.1} parent=51 // pred_fallthru
          _
        %s409 = sand.u32 %s42, 1
        %s410 = scalar_lea.sflag [#allocation3], %s409
        %s411 = sand.u32 %s42, 1
        %s412 = smul.addr %s411, 8
        %s413 = scalar_lea.vmem [#allocation2], %s412
        %p414 = pneg %p55
        %p415 = pneg %p52
        %s416 = sand.u32 %s34, 1
        %s417 = scalar_lea.sflag [#allocation6], %s416
        %s418 = sand.u32 %s68, 1
        %s419 = smul.addr %s418, 8
        %s420 = scalar_lea.vmem [#allocation5], %s419
        %p421 = pneg %p81
        %p422 = pneg %p78
        %p423 = pneg %p102
        %p424 = pneg %p99
        %p425 = pneg %p123
        %p426 = pneg %p120
        %p427 = pneg %p144
        %p428 = pneg %p141
        %p429 = pneg %p165
        %p430 = pneg %p162
        %p431 = pneg %p186
        %p432 = pneg %p183
        %p433 = pneg %p207
        %p434 = pneg %p204
        %p435 = pneg %p233
        %p436 = pneg %p230
        %s437 = sand.u32 %s220, 1
        %s438 = scalar_lea.sflag [#allocation4], %s437
        %s439 = sand.u32 %s220, 1
        %s440 = smul.addr %s439, 8
        %s441 = scalar_lea.vmem [#allocation11], %s440
        %p442 = pneg %p259
        %p443 = pneg %p256
        %s444 = sand.u32 %s246, 1
        %s445 = scalar_lea.sflag [#allocation13], %s444
        %s446 = sand.u32 %s246, 1
        %s447 = smul.addr %s446, 16
        %s448 = scalar_lea.vmem [#allocation12], %s447
        %v449 = vld [vmem:[%s378] sm:$0xff]
        %v450 = vld [vmem:[%s388] sm:$0xff]
        %v451 = vld [vmem:[#allocation7] sm:$0xff]
        %v452 = vld [vmem:[#allocation7 + $0x8] sm:$0xff]
        %v453 = vld [vmem:[#allocation7 + $0x10] sm:$0xff]
        %v454 = vld [vmem:[#allocation7 + $0x18] sm:$0xff]
        %v455 = vld [vmem:[%s3] sm:$0x1]
        %v457 = vperm.slane %v455, 0
        %vm459 = vcmask 261120
        %v461 = vsel %vm459, %v449, 0
        %463 = vmatpush.msra.mxu0 0.0
        %464 = vmatpush.msra.mxu0 0.0
        %465 = vmatpush.msra.mxu0 0.0
        %466 = vmatpush.msra.mxu0 0.0
        %467 = vmatpush.msra.mxu0 0.0
        %468 = vmatpush.msra.mxu0 0.0
        %469 = vmatpush.msra.mxu0 0.0
        %470 = vmatpush.msra.mxu0 0.0
        %471 = vmatpush.msra.mxu0 0.0
        %472 = vmatpush.msra.mxu0 0.0
        %473 = vmatpush.msra.mxu0 0.0
        %474 = vmatpush.msra.mxu0 0.0
        %475 = vmatpush.msra.mxu0 %v454
        %476 = vmatpush.msra.mxu0 %v453
        %477 = vmatpush.msra.mxu0 %v452
        %478 = vmatpush.msra.mxu0 %v451
        %479 = vmatmul.f32.gmra.mxu0 %v461
        %v480 = vpop.f32.mrf.mxu0
        %v481 = vadd.f32 %v457, %v480
        %482 = vdwg.mxu0
        %v483 = vld [vmem:[#allocation8] sm:$0xff]
        %v484 = vld [vmem:[#allocation8 + $0x8] sm:$0xff]
        %v485 = vld [vmem:[#allocation8 + $0x10] sm:$0xff]
        %v486 = vld [vmem:[#allocation8 + $0x18] sm:$0xff]
        %v487 = vld [vmem:[%s5] sm:$0x1]
        %v489 = vperm.slane %v487, 0
        %v492 = vsel %vm459, %v450, 0
        %494 = vmatpush.msra.mxu0 0.0
        %495 = vmatpush.msra.mxu0 0.0
        %496 = vmatpush.msra.mxu0 0.0
        %497 = vmatpush.msra.mxu0 0.0
        %498 = vmatpush.msra.mxu0 0.0
        %499 = vmatpush.msra.mxu0 0.0
        %500 = vmatpush.msra.mxu0 0.0
        %501 = vmatpush.msra.mxu0 0.0
        %502 = vmatpush.msra.mxu0 0.0
        %503 = vmatpush.msra.mxu0 0.0
        %504 = vmatpush.msra.mxu0 0.0
        %505 = vmatpush.msra.mxu0 0.0
        %506 = vmatpush.msra.mxu0 %v486
        %507 = vmatpush.msra.mxu0 %v485
        %508 = vmatpush.msra.mxu0 %v484
        %509 = vmatpush.msra.mxu0 %v483
        %510 = vmatmul.f32.gmra.mxu0 %v492
        %v511 = vpop.f32.mrf.mxu0
        %v512 = vadd.f32 %v489, %v511
        %513 = vdwg.mxu0
        %vm514 = vcmask 130048
        %v516 = vsel %vm514, %v512, 0
        %v519 = vsel %vm514, %v481, 0
        %521 = vmatpush.xpose.msra.mxu0 0.0
        %522 = vmatpush.xpose.msra.mxu0 0.0
        %523 = vmatpush.xpose.msra.mxu0 0.0
        %524 = vmatpush.xpose.msra.mxu0 0.0
        %525 = vmatpush.xpose.msra.mxu0 0.0
        %526 = vmatpush.xpose.msra.mxu0 0.0
        %527 = vmatpush.xpose.msra.mxu0 0.0
        %528 = vmatpush.xpose.msra.mxu0 0.0
        %529 = vmatpush.xpose.msra.mxu0 0.0
        %530 = vmatpush.xpose.msra.mxu0 0.0
        %531 = vmatpush.xpose.msra.mxu0 0.0
        %532 = vmatpush.xpose.msra.mxu0 0.0
        %533 = vmatpush.xpose.msra.mxu0 0.0
        %534 = vmatpush.xpose.msra.mxu0 0.0
        %535 = vmatpush.xpose.msra.mxu0 0.0
        %536 = vmatpush.xpose.msra.mxu0 %v519
        %537 = vmatmul.f32.gmra.mxu0 %v516
        %v538 = vpop.f32.mrf.mxu0
        %v539 = vadd.f32 0.0, %v538
        %540 = vdwg.mxu0
        %v541 = vmul.f32 %v539, 0.25
        %vm542 = vcmask 64512
        %v543 = vsel %vm542, %v541, -inf
        %544 = vmax.xlane.f32.xlu0 %v543
        %v545 = vpop.xlane.xlu0 %544
        %v546 = vsub.f32 %v541, %v545
        %v547 = vmul.f32 %v546, 1.442695
        %v548 = vpow.pop %v547
        %v549 = vsel %vm542, %v548, 0.0
        %550 = vadd.xlane.f32.xlu0 %v549
        %v551 = vpop.xlane.xlu0 %550
        %v552 = vrcp.pop %v551
        %v553 = vmul.f32 %v548, %v552
        %554 = vst.msk [vmem:[%s448] sm:$0xff] %vm542, %v553
        %v556 = vsel %vm542, %v553, 0
        %558 = vmatpush.msra.mxu0 0.0
        %559 = vmatpush.msra.mxu0 0.0
        %560 = vmatpush.msra.mxu0 0.0
        %561 = vmatpush.msra.mxu0 0.0
        %562 = vmatpush.msra.mxu0 0.0
        %563 = vmatpush.msra.mxu0 0.0
        %564 = vmatpush.msra.mxu0 0.0
        %565 = vmatpush.msra.mxu0 0.0
        %566 = vmatpush.msra.mxu0 0.0
        %567 = vmatpush.msra.mxu0 0.0
        %568 = vmatpush.msra.mxu0 0.0
        %569 = vmatpush.msra.mxu0 0.0
        %570 = vmatpush.msra.mxu0 0.0
        %571 = vmatpush.msra.mxu0 0.0
        %572 = vmatpush.msra.mxu0 0.0
        %573 = vmatpush.msra.mxu0 %v481
        %574 = vmatmul.f32.gmra.mxu0 %v556
        %v575 = vpop.f32.mrf.mxu0
        %v576 = vadd.f32 0.0, %v575
        %577 = vdwg.mxu0
        %v578 = vld [vmem:[#allocation10] sm:$0xff]
        %v579 = vld [vmem:[#allocation10 + $0x8] sm:$0xff]
        %580 = vrot.lane.b32.xlu0 %v512, 112
        %v581 = vpop.permute.xlu0 %580
        %582 = vrot.lane.b32.xlu0 %v481, 112
        %v583 = vpop.permute.xlu0 %582
        %v584 = vsel %vm514, %v581, 0
        %v586 = vsel %vm514, %v583, 0
        %588 = vmatpush.xpose.msra.mxu0 0.0
        %589 = vmatpush.xpose.msra.mxu0 0.0
        %590 = vmatpush.xpose.msra.mxu0 0.0
        %591 = vmatpush.xpose.msra.mxu0 0.0
        %592 = vmatpush.xpose.msra.mxu0 0.0
        %593 = vmatpush.xpose.msra.mxu0 0.0
        %594 = vmatpush.xpose.msra.mxu0 0.0
        %595 = vmatpush.xpose.msra.mxu0 0.0
        %596 = vmatpush.xpose.msra.mxu0 0.0
        %597 = vmatpush.xpose.msra.mxu0 0.0
        %598 = vmatpush.xpose.msra.mxu0 0.0
        %599 = vmatpush.xpose.msra.mxu0 0.0
        %600 = vmatpush.xpose.msra.mxu0 0.0
        %601 = vmatpush.xpose.msra.mxu0 0.0
        %602 = vmatpush.xpose.msra.mxu0 0.0
        %603 = vmatpush.xpose.msra.mxu0 %v586
        %604 = vmatmul.f32.gmra.mxu0 %v584
        %v605 = vpop.f32.mrf.mxu0
        %v606 = vadd.f32 0.0, %v605
        %607 = vdwg.mxu0
        %v608 = vmul.f32 %v606, 0.25
        %v609 = vsel %vm542, %v608, -inf
        %610 = vmax.xlane.f32.xlu0 %v609
        %v611 = vpop.xlane.xlu0 %610
        %v612 = vsub.f32 %v608, %v611
        %v613 = vmul.f32 %v612, 1.442695
        %v614 = vpow.pop %v613
        %v615 = vsel %vm542, %v614, 0.0
        %616 = vadd.xlane.f32.xlu0 %v615
        %v617 = vpop.xlane.xlu0 %616
        %v618 = vrcp.pop %v617
        %v619 = vmul.f32 %v614, %v618
        %s620 = scalar_lea.vmem %s448, 8 [#allocation12]
        %621 = vst.msk [vmem:[%s620] sm:$0xff] %vm542, %v619
        %v624 = vsel %vm542, %v619, 0
        %626 = vmatpush.msra.mxu0 0.0
        %627 = vmatpush.msra.mxu0 0.0
        %628 = vmatpush.msra.mxu0 0.0
        %629 = vmatpush.msra.mxu0 0.0
        %630 = vmatpush.msra.mxu0 0.0
        %631 = vmatpush.msra.mxu0 0.0
        %632 = vmatpush.msra.mxu0 0.0
        %633 = vmatpush.msra.mxu0 0.0
        %634 = vmatpush.msra.mxu0 0.0
        %635 = vmatpush.msra.mxu0 0.0
        %636 = vmatpush.msra.mxu0 0.0
        %637 = vmatpush.msra.mxu0 0.0
        %638 = vmatpush.msra.mxu0 0.0
        %639 = vmatpush.msra.mxu0 0.0
        %640 = vmatpush.msra.mxu0 0.0
        %641 = vmatpush.msra.mxu0 %v583
        %642 = vmatmul.f32.gmra.mxu0 %v624
        %v643 = vpop.f32.mrf.mxu0
        %v644 = vadd.f32 0.0, %v643
        %645 = vdwg.mxu0
        %v646 = vld [vmem:[#allocation10 + $0x10] sm:$0xff]
        %v647 = vld [vmem:[#allocation10 + $0x18] sm:$0xff]
        %v649 = vsel %vm514, %v644, 0
        %651 = vmatpush.msra.mxu0 0.0
        %652 = vmatpush.msra.mxu0 0.0
        %653 = vmatpush.msra.mxu0 0.0
        %654 = vmatpush.msra.mxu0 0.0
        %655 = vmatpush.msra.mxu0 0.0
        %656 = vmatpush.msra.mxu0 0.0
        %657 = vmatpush.msra.mxu0 0.0
        %658 = vmatpush.msra.mxu0 0.0
        %659 = vmatpush.msra.mxu0 0.0
        %660 = vmatpush.msra.mxu0 0.0
        %661 = vmatpush.msra.mxu0 0.0
        %662 = vmatpush.msra.mxu0 0.0
        %663 = vmatpush.msra.mxu0 0.0
        %664 = vmatpush.msra.mxu0 0.0
        %665 = vmatpush.msra.mxu0 %v647
        %666 = vmatpush.msra.mxu0 %v646
        %667 = vmatmul.f32.gmra.mxu0 %v649
        %v668 = vpop.f32.mrf.mxu0
        %v669 = vadd.f32 0.0, %v668
        %670 = vdwg.mxu0
        %v672 = vsel %vm514, %v576, 0
        %674 = vmatpush.msra.mxu0 0.0
        %675 = vmatpush.msra.mxu0 0.0
        %676 = vmatpush.msra.mxu0 0.0
        %677 = vmatpush.msra.mxu0 0.0
        %678 = vmatpush.msra.mxu0 0.0
        %679 = vmatpush.msra.mxu0 0.0
        %680 = vmatpush.msra.mxu0 0.0
        %681 = vmatpush.msra.mxu0 0.0
        %682 = vmatpush.msra.mxu0 0.0
        %683 = vmatpush.msra.mxu0 0.0
        %684 = vmatpush.msra.mxu0 0.0
        %685 = vmatpush.msra.mxu0 0.0
        %686 = vmatpush.msra.mxu0 0.0
        %687 = vmatpush.msra.mxu0 0.0
        %688 = vmatpush.msra.mxu0 %v579
        %689 = vmatpush.msra.mxu0 %v578
        %690 = vmatmul.f32.gmra.mxu0 %v672
        %v691 = vpop.f32.mrf.mxu0
        %v692 = vadd.f32 %v669, %v691
        %693 = vdwg.mxu0
        %v694 = vld [vmem:[%s7] sm:$0x1]
        %v696 = vperm.slane %v694, 0
        %v698 = vadd.f32 %v692, %v696
        %699 = vst.msk [vmem:[%s441] sm:$0xff] %vm459, %v698
        %s700 = sand.u32 %s220, 1
        %s701 = scalar_lea.sflag [#allocation4], %s700
        %s702 = sand.u32 %s220, 1
        %s703 = smul.addr %s702, 8
        %s704 = scalar_lea.vmem [#allocation11], %s703
        %s705 = sand.u32 %s246, 1
        %s706 = scalar_lea.sflag [#allocation13], %s705
        %s707 = sand.u32 %s246, 1
        %s708 = smul.addr %s707, 16
        %s709 = scalar_lea.vmem [#allocation12], %s708
        // Predicated region
        $region73: #{tpu_custom_call.1} parent=51 // pred_check
          %p710 = pneg %p230
        $region74: #{tpu_custom_call.1} parent=51 // pred_check_branch
          %712 = sbr.rel (%p710) target = $region76
        $region75: #{tpu_custom_call.1} parent=51 // pred_region
          %714 = vsyncadd %s701, 0
          %s715 = smul.addr %s34, 8
          %s716 = scalar_lea.hbm %s8, %s715
          %s718 = sshll.u32 %s704, 4
          %s719 = int_to_ptr.vmem [resolvable:$true] %s718
          %s720 = sshll.u32 %s716, 4
          %s721 = int_to_ptr.hbm [resolvable:$true] %s720
          %723 = dma.vmem_to_hbm [thread:$0]  %s719, 128, %s721, %s701
        $region76: #{tpu_custom_call.1} parent=51 // pred_fallthru
          _
        // Predicated region
        $region77: #{tpu_custom_call.1} parent=51 // pred_check
          %p724 = pneg %p256
        $region78: #{tpu_custom_call.1} parent=51 // pred_check_branch
          %726 = sbr.rel (%p724) target = $region80
        $region79: #{tpu_custom_call.1} parent=51 // pred_region
          %728 = vsyncadd %s706, 0
          %s729 = smul.addr %s34, 8
          %s730 = scalar_lea.hbm %s9, %s729
          %s731 = sshll.u32 %s709, 4
          %s732 = int_to_ptr.vmem [resolvable:$true] %s731
          %s733 = sshll.u32 %s730, 4
          %s734 = int_to_ptr.hbm [resolvable:$true] %s733
          %739 = dma.vmem_to_hbm [thread:$0]  %s732, 256, %s734, %s706, 128, 256, 8
        $region80: #{tpu_custom_call.1} parent=51 // pred_fallthru
          _
      $region52: #{tpu_custom_call.1} parent=5 // pred_fallthru
        _
      %p740 = scmp.le.s32.totalorder 2, %s29
      // Predicated region
      $region81: #{tpu_custom_call.1} parent=5 // pred_check
        %p741 = pneg %p740
      $region82: #{tpu_custom_call.1} parent=5 // pred_check_branch
        %743 = sbr.rel (%p741) target = $region84
      $region83: #{tpu_custom_call.1} parent=5 // pred_region
        %s744 = ssub.s32 %s29, 2
        // Predicated region
        $region85: #{tpu_custom_call.1} parent=83 // pred_check
          %p745 = pneg %p236
        $region86: #{tpu_custom_call.1} parent=83 // pred_check_branch
          %747 = sbr.rel (%p745) target = $region88
        $region87: #{tpu_custom_call.1} parent=83 // pred_region
          %s748 = sand.u32 %s221, 1
          %s749 = scalar_lea.sflag [#allocation4], %s748
          %s750 = sand.u32 %s221, 1
          %s751 = smul.addr %s750, 8
          %s752 = scalar_lea.vmem [#allocation11], %s751
          %754 = dma.done %s749, 128
        $region88: #{tpu_custom_call.1} parent=83 // pred_fallthru
          _
        // Predicated region
        $region89: #{tpu_custom_call.1} parent=83 // pred_check
          %p755 = pneg %p262
        $region90: #{tpu_custom_call.1} parent=83 // pred_check_branch
          %757 = sbr.rel (%p755) target = $region92
        $region91: #{tpu_custom_call.1} parent=83 // pred_region
          %s758 = sand.u32 %s247, 1
          %s759 = scalar_lea.sflag [#allocation13], %s758
          %s760 = sand.u32 %s247, 1
          %s761 = smul.addr %s760, 16
          %s762 = scalar_lea.vmem [#allocation12], %s761
          %764 = dma.done %s759, 256
        $region92: #{tpu_custom_call.1} parent=83 // pred_fallthru
          _
      $region84: #{tpu_custom_call.1} parent=5 // pred_fallthru
        _
    $region6: #{tpu_custom_call.1} parent=1 // loop_footer
      %s33 = sadd.s32 1, %s29
    $region7: #{tpu_custom_call.1} parent=1 // loop_footer_branch
      %28 = sbr.rel target = $region3
    $region8: #{tpu_custom_call.1} parent=1 // loop_exit
      _
    %765 = vsyncpa [#allocation3], 1
    %s766 = scalar_lea.sflag [#allocation3], 1
    %767 = vsyncpa %s766, 1
    %768 = vsyncpa [#allocation6], 1
    %s769 = scalar_lea.sflag [#allocation6], 1
    %770 = vsyncpa %s769, 1
    %771 = vsyncpa [#allocation9], 1
    %772 = vsyncpa [#allocation4], 1
    %s773 = scalar_lea.sflag [#allocation4], 1
    %774 = vsyncpa %s773, 1
    %775 = vsyncpa [#allocation13], 1
    %s776 = scalar_lea.sflag [#allocation13], 1
    %777 = vsyncpa %s776, 1

</llo_original>
